<compile_context>
chip_gen: v7x
topology: tpu7x:2x2x1
jax: 0.10.0
libtpu: 0.0.40
codegen_flags: <defaults>
</compile_context>

<pallas_src>
import numpy as np
import jax
import jax.numpy as jnp
from jax import lax
from jax.experimental import pallas as pl
from jax.experimental.pallas import tpu as pltpu

EPS = 1e-5  # torch.nn.GroupNorm default


def get_num_groups(num_channels, channels_per_group=8):
    # TODO(synk): original eqnr `get_num_groups` source not shown; assume
    # 8 channels per group (falls back to a single group if not divisible).
    if num_channels % channels_per_group == 0:
        return num_channels // channels_per_group
    return 1


def _group_matrix(C, G):
    """(C, C) 0/1 matrix with A[i, j] = 1 iff channels i, j share a group."""
    cpg = C // G
    cid = np.arange(C)
    return jnp.asarray((cid[:, None] // cpg == cid[None, :] // cpg)
                       .astype(np.float32))


def _pick_block_b(B, hw, c_in, num_channels, budget_bytes=8 << 20):
    """Largest batch block fitting the VMEM budget while keeping the parallel
    grid length >= 2 (so both v7x TensorCores get work)."""
    c_max = max((c_in,) + tuple(num_channels))
    c_out = num_channels[-1]

    def footprint(bt):
        io = 2 * 4 * bt * hw * (c_in + c_out)   # double-buffered in/out blocks
        act = 4 * 4 * bt * hw * c_max           # live activations (unrolled loop)
        return io + act

    best = 1
    for d in range(1, B + 1):
        if B % d:
            continue
        if footprint(d) > budget_bytes:
            continue
        if B >= 2 and (B // d) < 2:
            continue
        best = d
    return best


def _make_kernel(num_channels, groups, block_b, hw):
    """Builds a kernel closed over the (static) layer structure."""
    num_layers = len(num_channels)

    def kernel(*refs):
        x_ref = refs[0]
        o_ref = refs[-1]
        p = refs[1:-1]

        # Load the (tiny) per-layer parameters once, outside the sample loop.
        layers = []
        idx = 0
        for i in range(num_layers):
            w = p[idx][...]                    # (C_out_i, C_in_i)
            b = p[idx + 1][...]                # (C_out_i, 1)
            idx += 2
            if i != num_layers - 1:
                gamma = p[idx][...]            # (C_out_i, 1)
                beta = p[idx + 1][...]         # (C_out_i, 1)
                A = p[idx + 2][...]            # (C_out_i, C_out_i) same-group mask
                idx += 3
                layers.append((w, b, gamma, beta, A))
            else:
                layers.append((w, b, None, None, None))

        for s in range(block_b):
            h = x_ref[s]                       # (C_in, HW), channel-major
            for i, (w, b, gamma, beta, A) in enumerate(layers):
                # 1x1 conv == per-pixel channel matmul on the MXU
                # (bias folded into the GroupNorm shift for hidden layers).
                if w.shape[0] >= 128 and w.shape[1] >= 128:
                    z = jnp.dot(w.astype(jnp.bfloat16), h.astype(jnp.bfloat16),
                                preferred_element_type=jnp.float32)
                else:
                    z = jnp.dot(w, h, preferred_element_type=jnp.float32)

                if i == num_layers - 1:
                    h = z + b
                    continue

                C = num_channels[i]
                cpg = C // groups[i]
                n = float(hw * cpg)

                # GroupNorm stats of y = z + b, with the bias folded in
                # analytically on (C,1) vectors (no full-tile bias add).
                # NOTE: E[y^2]-E[y]^2 in f32; fine at these magnitudes
                # (switch to two-pass variance for very large activations).
                sc = jnp.sum(z, axis=1, keepdims=True)        # (C, 1)
                ss = jnp.sum(z * z, axis=1, keepdims=True)    # (C, 1)
                sy = sc + float(hw) * b
                syy = ss + 2.0 * b * sc + float(hw) * (b * b)
                # One tiny matmul per stat sums within a group and broadcasts
                # back per channel (A is the precomputed same-group matrix).
                gsum = jnp.dot(A, sy, preferred_element_type=jnp.float32)
                gssum = jnp.dot(A, syy, preferred_element_type=jnp.float32)
                mean_c = gsum * (1.0 / n)
                var_c = gssum * (1.0 / n) - mean_c * mean_c   # biased (torch)
                inv_c = lax.rsqrt(var_c + EPS)                # EUP

                # Fold GN affine + conv bias into one per-channel scale/shift.
                scale = inv_c * gamma                          # (C, 1)
                shift = (b - mean_c) * scale + beta            # (C, 1)
                t = z * scale + shift
                h = jnp.maximum(t, 0.2 * t)                    # LeakyReLU(0.2)

            o_ref[s] = h

    return kernel


def inverse_projection(x_nchw, params, input_shape, num_channels, block_b=None):
    """Pallas implementation of InverseProjection.forward.

    x_nchw: (B, C_in, H, W) float32 (PyTorch NCHW convention)
    params: {'conv': [(w_i, b_i), ...], 'gn': {i: (gamma_i, beta_i)}}
            w_i has torch layout (C_out_i, C_in_i) (= weight[:, :, 0, 0]);
            b_i / gamma_i / beta_i have shape (C_out_i, 1).
    returns: (B, C_out // W, W, H, W) float32
    """
    B, C_in, H, W = x_nchw.shape
    HW = H * W
    C_out = num_channels[-1]
    assert C_out % W == 0
    num_layers = len(num_channels)
    groups = [get_num_groups(c) for c in num_channels]

    # Channel-major flattened layout: NCHW -> (B, C, H*W).  Pure reshape.
    x = x_nchw.reshape(B, C_in, HW).astype(jnp.float32)

    if block_b is None:
        block_b = _pick_block_b(B, HW, C_in, num_channels)
    assert B % block_b == 0
    grid = (B // block_b,)

    kernel = _make_kernel(tuple(num_channels), groups, block_b, HW)

    flat_params = []
    in_specs = [pl.BlockSpec((block_b, C_in, HW), lambda g: (g, 0, 0))]
    for i in range(num_layers):
        w, bb = params['conv'][i]
        flat_params += [w, bb]
        in_specs += [pl.BlockSpec(w.shape, lambda g: (0, 0)),
                     pl.BlockSpec(bb.shape, lambda g: (0, 0))]
        if i != num_layers - 1:
            ga, be = params['gn'][i]
            A = _group_matrix(num_channels[i], groups[i])
            flat_params += [ga, be, A]
            in_specs += [pl.BlockSpec(ga.shape, lambda g: (0, 0)),
                         pl.BlockSpec(be.shape, lambda g: (0, 0)),
                         pl.BlockSpec(A.shape, lambda g: (0, 0))]

    # Explicit VMEM budget (v7x has only 64 MiB physical / 32 MiB scoped).
    c_max = max((C_in,) + tuple(num_channels))
    param_bytes = sum(int(np.prod(p.shape)) for p in flat_params) * 4
    vmem_est = (2 * 4 * block_b * HW * (C_in + C_out)   # in/out, double-buffered
                + 4 * 4 * block_b * HW * c_max          # live activations
                + 2 * param_bytes)
    vmem_limit = int(min(max(vmem_est, 16 << 20), 32 << 20))

    out = pl.pallas_call(
        kernel,
        out_shape=jax.ShapeDtypeStruct((B, C_out, HW), jnp.float32),
        grid=grid,
        in_specs=in_specs,
        out_specs=pl.BlockSpec((block_b, C_out, HW), lambda g: (g, 0, 0)),
        compiler_params=pltpu.CompilerParams(
            dimension_semantics=("parallel",),
            vmem_limit_bytes=vmem_limit),
    )(x, *flat_params)

    # (B, C_out, HW) is already NCHW flattened; torch's .view is a pure reshape.
    depth = C_out // W
    return out.reshape(B, depth, W, H, W)


def reference(x_nchw, params, num_channels):
    """Pure-JAX reference mirroring the PyTorch forward exactly."""
    B, C_in, H, W = x_nchw.shape
    h = x_nchw.astype(jnp.float32)
    num_layers = len(num_channels)
    for i in range(num_layers):
        w, bb = params['conv'][i]  # (C_out_i, C_in_i), (C_out_i, 1)
        h = jnp.einsum('bchw,dc->bdhw', h, w) + bb.reshape(1, -1, 1, 1)
        if i != num_layers - 1:
            ga, be = params['gn'][i]
            C = num_channels[i]
            G = get_num_groups(C)
            hh = h.reshape(B, G, C // G, H, W)
            mean = hh.mean(axis=(2, 3, 4), keepdims=True)
            var = hh.var(axis=(2, 3, 4), keepdims=True)
            hh = (hh - mean) / jnp.sqrt(var + EPS)
            h = (hh.reshape(B, C, H, W) * ga.reshape(1, -1, 1, 1)
                 + be.reshape(1, -1, 1, 1))
            h = jnp.where(h >= 0, h, 0.2 * h)
    depth = num_channels[-1] // W
    return h.reshape(B, depth, W, H, W)


def init_params(key, input_shape, num_channels):
    params = {'conv': [], 'gn': {}}
    in_c = input_shape[0]
    num_layers = len(num_channels)
    for i, out_c in enumerate(num_channels):
        key, k1, k2, k3, k4 = jax.random.split(key, 5)
        w = jax.random.normal(k1, (out_c, in_c), jnp.float32) * 0.1
        b = jax.random.normal(k2, (out_c, 1), jnp.float32) * 0.1
        params['conv'].append((w, b))
        if i != num_layers - 1:
            gamma = 1.0 + 0.1 * jax.random.normal(k3, (out_c, 1), jnp.float32)
            beta = 0.1 * jax.random.normal(k4, (out_c, 1), jnp.float32)
            params['gn'][i] = (gamma, beta)
        in_c = out_c
    return params


if __name__ == "__main__":
    key = jax.random.PRNGKey(0)
    B = 2
    input_shape = (4, 16, 16)       # (channels, height, width)
    num_channels = (32, 64)         # 64 % 16 == 0 -> depth = 4

    key, kx, kp = jax.random.split(key, 3)
    x = jax.random.normal(kx, (B,) + input_shape, jnp.float32)
    params = init_params(kp, input_shape, num_channels)

    out = inverse_projection(x, params, input_shape, num_channels)
    out = jax.block_until_ready(out)

    expected_shape = (B, num_channels[-1] // input_shape[-1],
                      input_shape[-1], input_shape[1], input_shape[2])
    assert out.shape == expected_shape, (out.shape, expected_shape)

    ref = jax.block_until_ready(reference(x, params, num_channels))
    assert jnp.allclose(out, ref, rtol=1e-4, atol=1e-4), float(
        jnp.max(jnp.abs(out - ref)))

    print("KERNEL_OK")
</pallas_src>

<mosaic_0001>
module attributes {stable_mosaic.version = 11 : i64} {
  func.func @kernel(%arg0: i32, %arg1: memref<1x4x256xf32, #tpu.memory_space<vmem>>, %arg2: memref<32x4xf32, #tpu.memory_space<vmem>>, %arg3: memref<32x1xf32, #tpu.memory_space<vmem>>, %arg4: memref<32x1xf32, #tpu.memory_space<vmem>>, %arg5: memref<32x1xf32, #tpu.memory_space<vmem>>, %arg6: memref<32x32xf32, #tpu.memory_space<vmem>>, %arg7: memref<64x32xf32, #tpu.memory_space<vmem>>, %arg8: memref<64x1xf32, #tpu.memory_space<vmem>>, %arg9: memref<1x64x256xf32, #tpu.memory_space<vmem>>) attributes {dimension_semantics = [#tpu.dimension_semantics<parallel>], iteration_bounds = array<i64: 2>, scalar_prefetch = 0 : i64, scratch_operands = 0 : i64, tpu.core_type = #tpu.core_type<tc>, window_params = [{transform_indices = @transform_0, window_bounds = array<i64: 1, 4, 256>}, {pipeline_mode = #tpu.pipeline_mode<synchronous>, transform_indices = @transform_1, window_bounds = array<i64: 32, 4>}, {pipeline_mode = #tpu.pipeline_mode<synchronous>, transform_indices = @transform_2, window_bounds = array<i64: 32, 1>}, {pipeline_mode = #tpu.pipeline_mode<synchronous>, transform_indices = @transform_3, window_bounds = array<i64: 32, 1>}, {pipeline_mode = #tpu.pipeline_mode<synchronous>, transform_indices = @transform_4, window_bounds = array<i64: 32, 1>}, {pipeline_mode = #tpu.pipeline_mode<synchronous>, transform_indices = @transform_5, window_bounds = array<i64: 32, 32>}, {pipeline_mode = #tpu.pipeline_mode<synchronous>, transform_indices = @transform_6, window_bounds = array<i64: 64, 32>}, {pipeline_mode = #tpu.pipeline_mode<synchronous>, transform_indices = @transform_7, window_bounds = array<i64: 64, 1>}, {transform_indices = @transform_8, window_bounds = array<i64: 1, 64, 256>}]} {
    %c0 = arith.constant 0 : index
    %c0_0 = arith.constant 0 : index
    %0 = vector.load %arg2[%c0, %c0_0] : memref<32x4xf32, #tpu.memory_space<vmem>>, vector<32x4xf32>
    %c0_1 = arith.constant 0 : index
    %c0_2 = arith.constant 0 : index
    %1 = vector.load %arg3[%c0_1, %c0_2] : memref<32x1xf32, #tpu.memory_space<vmem>>, vector<32x1xf32>
    %c0_3 = arith.constant 0 : index
    %c0_4 = arith.constant 0 : index
    %2 = vector.load %arg4[%c0_3, %c0_4] : memref<32x1xf32, #tpu.memory_space<vmem>>, vector<32x1xf32>
    %c0_5 = arith.constant 0 : index
    %c0_6 = arith.constant 0 : index
    %3 = vector.load %arg5[%c0_5, %c0_6] : memref<32x1xf32, #tpu.memory_space<vmem>>, vector<32x1xf32>
    %c0_7 = arith.constant 0 : index
    %c0_8 = arith.constant 0 : index
    %4 = vector.load %arg6[%c0_7, %c0_8] : memref<32x32xf32, #tpu.memory_space<vmem>>, vector<32x32xf32>
    %c0_9 = arith.constant 0 : index
    %c0_10 = arith.constant 0 : index
    %5 = vector.load %arg7[%c0_9, %c0_10] : memref<64x32xf32, #tpu.memory_space<vmem>>, vector<64x32xf32>
    %c0_11 = arith.constant 0 : index
    %c0_12 = arith.constant 0 : index
    %6 = vector.load %arg8[%c0_11, %c0_12] : memref<64x1xf32, #tpu.memory_space<vmem>>, vector<64x1xf32>
    %c0_13 = arith.constant 0 : index
    %c0_14 = arith.constant 0 : index
    %c0_15 = arith.constant 0 : index
    %7 = vector.load %arg1[%c0_13, %c0_14, %c0_15] : memref<1x4x256xf32, #tpu.memory_space<vmem>>, vector<1x4x256xf32>
    %8 = vector.shape_cast %7 : vector<1x4x256xf32> to vector<4x256xf32>
    %cst = arith.constant dense<0.000000e+00> : vector<32x256xf32>
    %9 = tpu.matmul %0, %8, %cst {dimension_numbers = #tpu.dot_dimension_numbers<[1], [0], [0], [1], [0, 0, 1, 1], [], []>} : vector<32x4xf32>, vector<4x256xf32>, vector<32x256xf32> -> vector<32x256xf32>
    %cst_16 = arith.constant dense<0.000000e+00> : vector<32xf32>
    %10 = vector.multi_reduction <add>, %9, %cst_16 [1] : vector<32x256xf32> to vector<32xf32>
    %11 = vector.shape_cast %10 : vector<32xf32> to vector<32x1xf32>
    %12 = arith.mulf %9, %9 : vector<32x256xf32>
    %cst_17 = arith.constant dense<0.000000e+00> : vector<32xf32>
    %13 = vector.multi_reduction <add>, %12, %cst_17 [1] : vector<32x256xf32> to vector<32xf32>
    %14 = vector.shape_cast %13 : vector<32xf32> to vector<32x1xf32>
    %cst_18 = arith.constant 2.560000e+02 : f32
    %15 = vector.broadcast %cst_18 : f32 to vector<32x1xf32>
    %16 = arith.mulf %15, %1 : vector<32x1xf32>
    %17 = arith.addf %11, %16 : vector<32x1xf32>
    %cst_19 = arith.constant 2.000000e+00 : f32
    %18 = vector.broadcast %cst_19 : f32 to vector<32x1xf32>
    %19 = arith.mulf %18, %1 : vector<32x1xf32>
    %20 = arith.mulf %19, %11 : vector<32x1xf32>
    %21 = arith.addf %14, %20 : vector<32x1xf32>
    %22 = arith.mulf %1, %1 : vector<32x1xf32>
    %cst_20 = arith.constant 2.560000e+02 : f32
    %23 = vector.broadcast %cst_20 : f32 to vector<32x1xf32>
    %24 = arith.mulf %23, %22 : vector<32x1xf32>
    %25 = arith.addf %21, %24 : vector<32x1xf32>
    %cst_21 = arith.constant dense<0.000000e+00> : vector<32x1xf32>
    %26 = tpu.matmul %4, %17, %cst_21 {dimension_numbers = #tpu.dot_dimension_numbers<[1], [0], [0], [1], [0, 0, 1, 1], [], []>} : vector<32x32xf32>, vector<32x1xf32>, vector<32x1xf32> -> vector<32x1xf32>
    %cst_22 = arith.constant dense<0.000000e+00> : vector<32x1xf32>
    %27 = tpu.matmul %4, %25, %cst_22 {dimension_numbers = #tpu.dot_dimension_numbers<[1], [0], [0], [1], [0, 0, 1, 1], [], []>} : vector<32x32xf32>, vector<32x1xf32>, vector<32x1xf32> -> vector<32x1xf32>
    %cst_23 = arith.constant 4.8828125E-4 : f32
    %28 = vector.broadcast %cst_23 : f32 to vector<32x1xf32>
    %29 = arith.mulf %26, %28 : vector<32x1xf32>
    %cst_24 = arith.constant 4.8828125E-4 : f32
    %30 = vector.broadcast %cst_24 : f32 to vector<32x1xf32>
    %31 = arith.mulf %27, %30 : vector<32x1xf32>
    %32 = arith.mulf %29, %29 : vector<32x1xf32>
    %33 = arith.subf %31, %32 : vector<32x1xf32>
    %cst_25 = arith.constant 9.99999974E-6 : f32
    %34 = vector.broadcast %cst_25 : f32 to vector<32x1xf32>
    %35 = arith.addf %33, %34 : vector<32x1xf32>
    %36 = math.rsqrt %35 : vector<32x1xf32>
    %37 = arith.mulf %36, %2 : vector<32x1xf32>
    %38 = arith.subf %1, %29 : vector<32x1xf32>
    %39 = arith.mulf %38, %37 : vector<32x1xf32>
    %40 = arith.addf %39, %3 : vector<32x1xf32>
    %41 = vector.broadcast %37 : vector<32x1xf32> to vector<32x256xf32>
    %42 = arith.mulf %9, %41 : vector<32x256xf32>
    %43 = vector.broadcast %40 : vector<32x1xf32> to vector<32x256xf32>
    %44 = arith.addf %42, %43 : vector<32x256xf32>
    %cst_26 = arith.constant 2.000000e-01 : f32
    %45 = vector.broadcast %cst_26 : f32 to vector<32x256xf32>
    %46 = arith.mulf %45, %44 : vector<32x256xf32>
    %47 = arith.maximumf %44, %46 : vector<32x256xf32>
    %cst_27 = arith.constant dense<0.000000e+00> : vector<64x256xf32>
    %48 = tpu.matmul %5, %47, %cst_27 {dimension_numbers = #tpu.dot_dimension_numbers<[1], [0], [0], [1], [0, 0, 1, 1], [], []>} : vector<64x32xf32>, vector<32x256xf32>, vector<64x256xf32> -> vector<64x256xf32>
    %49 = vector.broadcast %6 : vector<64x1xf32> to vector<64x256xf32>
    %50 = arith.addf %48, %49 : vector<64x256xf32>
    %c0_28 = arith.constant 0 : index
    %c0_29 = arith.constant 0 : index
    %c0_30 = arith.constant 0 : index
    %51 = vector.load %arg9[%c0_28, %c0_29, %c0_30] : memref<1x64x256xf32, #tpu.memory_space<vmem>>, vector<1x64x256xf32>
    %52 = vector.shape_cast %51 : vector<1x64x256xf32> to vector<64x256xf32>
    %53 = vector.shape_cast %50 : vector<64x256xf32> to vector<1x64x256xf32>
    tpu.vector_store %arg9[%c0_28, %c0_29, %c0_30], %53 {strides = array<i32>} : memref<1x64x256xf32, #tpu.memory_space<vmem>>, vector<1x64x256xf32>,
    return
  }
  func.func @transform_0(%arg0: i32) -> (i32, i32, i32) {
    %c0_i32 = arith.constant 0 : i32
    %c0_i32_0 = arith.constant 0 : i32
    %c0_i32_1 = arith.constant 0 : i32
    return %arg0, %c0_i32, %c0_i32_0 : i32, i32, i32
  }
  func.func @transform_1(%arg0: i32) -> (i32, i32) {
    %c0_i32 = arith.constant 0 : i32
    %c0_i32_0 = arith.constant 0 : i32
    %c0_i32_1 = arith.constant 0 : i32
    return %c0_i32, %c0_i32_0 : i32, i32
  }
  func.func @transform_2(%arg0: i32) -> (i32, i32) {
    %c0_i32 = arith.constant 0 : i32
    %c0_i32_0 = arith.constant 0 : i32
    %c0_i32_1 = arith.constant 0 : i32
    return %c0_i32, %c0_i32_0 : i32, i32
  }
  func.func @transform_3(%arg0: i32) -> (i32, i32) {
    %c0_i32 = arith.constant 0 : i32
    %c0_i32_0 = arith.constant 0 : i32
    %c0_i32_1 = arith.constant 0 : i32
    return %c0_i32, %c0_i32_0 : i32, i32
  }
  func.func @transform_4(%arg0: i32) -> (i32, i32) {
    %c0_i32 = arith.constant 0 : i32
    %c0_i32_0 = arith.constant 0 : i32
    %c0_i32_1 = arith.constant 0 : i32
    return %c0_i32, %c0_i32_0 : i32, i32
  }
  func.func @transform_5(%arg0: i32) -> (i32, i32) {
    %c0_i32 = arith.constant 0 : i32
    %c0_i32_0 = arith.constant 0 : i32
    %c0_i32_1 = arith.constant 0 : i32
    return %c0_i32, %c0_i32_0 : i32, i32
  }
  func.func @transform_6(%arg0: i32) -> (i32, i32) {
    %c0_i32 = arith.constant 0 : i32
    %c0_i32_0 = arith.constant 0 : i32
    %c0_i32_1 = arith.constant 0 : i32
    return %c0_i32, %c0_i32_0 : i32, i32
  }
  func.func @transform_7(%arg0: i32) -> (i32, i32) {
    %c0_i32 = arith.constant 0 : i32
    %c0_i32_0 = arith.constant 0 : i32
    %c0_i32_1 = arith.constant 0 : i32
    return %c0_i32, %c0_i32_0 : i32, i32
  }
  func.func @transform_8(%arg0: i32) -> (i32, i32, i32) {
    %c0_i32 = arith.constant 0 : i32
    %c0_i32_0 = arith.constant 0 : i32
    %c0_i32_1 = arith.constant 0 : i32
    return %arg0, %c0_i32, %c0_i32_0 : i32, i32, i32
  }
}

</mosaic_0001>

<llo_original>
// kernel: tpu_custom_call.1
$region0: #{tpu_custom_call.1}
  #allocation0 [shape = 'u32[]', space=smem, size = 0x4, offset = 0x4, fixed_abs, tag = 'smem constant byte address 0x4 - core index']
  #allocation1 [shape = 'u32[144,128]{1,0:T(1,128)}', space=vmem, size = 0x12000, scoped, tag = 'internal scratch']
  %s0 = inlined_call_operand.vmem [shape: f32[2,4,256], index: 0, kind: input, shape index: {}]
  %s1 = inlined_call_operand.vmem [shape: f32[32,4], index: 1, kind: input, shape index: {}]
  %s2 = inlined_call_operand.vmem [shape: f32[32,1], index: 2, kind: input, shape index: {}]
  %s3 = inlined_call_operand.vmem [shape: f32[32,1], index: 3, kind: input, shape index: {}]
  %s4 = inlined_call_operand.vmem [shape: f32[32,1], index: 4, kind: input, shape index: {}]
  %s5 = inlined_call_operand.vmem [shape: f32[32,32], index: 5, kind: input, shape index: {}]
  %s6 = inlined_call_operand.vmem [shape: f32[64,32], index: 6, kind: input, shape index: {}]
  %s7 = inlined_call_operand.vmem [shape: f32[64,1], index: 7, kind: input, shape index: {}]
  %s8 = inlined_call_operand.hbm [shape: f32[2,64,256], index: 8, kind: output, shape index: {}]
  %s9 = sld [smem:[#allocation0]]
  $region65: #{tpu_custom_call.1} parent=0
    _
  %s11 = ssub.s32 1, %s9
  %s12 = scalar_select 0, %s11, %s9
  $region1: #{tpu_custom_call.1} parent=0
    #allocation2 [shape = 'u8[131072]{0}', space=vmem, size = 0x20000, scoped, tag = 'output window, operand 0']
    #allocation3 [shape = 's32[2]{0}', space=sflag, size = 0x8, scoped, tag = 'scoped memory for tpu_custom_call.1']
    %13 = vsyncpa [#allocation3], 0
    %s14 = scalar_lea.sflag [#allocation3], 1
    %15 = vsyncpa %s14, 0
    loop: start=0, step=1, limit=4
    $region2: #{tpu_custom_call.1} parent=1 // loop_pre_header
      _
    $region3: #{tpu_custom_call.1} parent=1 // loop_header
      %s17 = sphi 0, %s21
      %p18 = scmp.ge.s32.totalorder %s17, 4
      %s27 = sphi 0, %s29
      %s30 = sphi 0, %s27
      %s31 = sphi 0, %s30
      %s47 = sphi 0, %s31
      %s51 = sphi 0, %s51
      %s53 = sphi 0, %s51
      %s54 = sphi 0, %s53
      %s68 = sphi 0, %s54
      %s72 = sphi 0, %s72
      %s74 = sphi 0, %s72
      %s75 = sphi 0, %s74
      %s89 = sphi 0, %s75
      %s93 = sphi 0, %s93
      %s95 = sphi 0, %s93
      %s96 = sphi 0, %s95
      %s110 = sphi 0, %s96
      %s114 = sphi 0, %s114
      %s116 = sphi 0, %s114
      %s117 = sphi 0, %s116
      %s131 = sphi 0, %s117
      %s135 = sphi 0, %s135
      %s137 = sphi 0, %s135
      %s138 = sphi 0, %s137
      %s152 = sphi 0, %s138
      %s156 = sphi 0, %s156
      %s158 = sphi 0, %s156
      %s159 = sphi 0, %s158
      %s173 = sphi 0, %s159
      %s177 = sphi 0, %s177
      %s179 = sphi 0, %s177
      %s180 = sphi 0, %s179
      %s194 = sphi 0, %s180
      %s200 = sphi 0, %s202
      %s203 = sphi 0, %s200
      %s204 = sphi 0, %s203
      %s220 = sphi 0, %s204
    $region4: #{tpu_custom_call.1} parent=1 // loop_header_branch
      %20 = sbr.rel (%p18) target = $region8
    $region5: #{tpu_custom_call.1} parent=1 // loop_body
      %s22 = ssub.s32 %s17, 1
      %s23 = ssub.s32 %s17, 2
      %s24 = sadd.s32 %s17, 1
      %s25 = ssub.s32 %s17, %s24
      %p26 = scmp.eq.s32.totalorder %s25, 0
      %s28 = sadd.s32 %s27, 1
      %s29 = scalar_select %p26, %s27, %s28
      %p32 = pneg %p26
      %p33 = scmp.eq.s32.totalorder %s17, 1
      %p34 = por %p32, %p33
      %p35 = scmp.ne.s32.totalorder %s27, %s30
      %p36 = scmp.eq.s32.totalorder %s17, 0
      %p37 = por %p35, %p36
      %p38 = scmp.ne.s32.totalorder %s27, %s30
      %p39 = scmp.eq.s32.totalorder %s22, 1
      %p40 = por %p38, %p39
      %p41 = scmp.ne.s32.totalorder %s30, %s31
      %p42 = scmp.eq.s32.totalorder %s22, 0
      %p43 = por %p41, %p42
      %p44 = scmp.ne.s32.totalorder %s30, %s31
      %p45 = scmp.eq.s32.totalorder %s23, 1
      %p46 = por %p44, %p45
      %p48 = scmp.ne.s32.totalorder %s31, %s47
      %p49 = scmp.eq.s32.totalorder %s23, 0
      %p50 = por %p48, %p49
      %s52 = sadd.s32 %s51, 1
      %p55 = scmp.eq.s32.totalorder %s17, 1
      %p56 = scmp.ne.s32.totalorder %s51, %s53
      %p57 = scmp.eq.s32.totalorder %s17, 0
      %p58 = por %p56, %p57
      %p59 = scmp.ne.s32.totalorder %s51, %s53
      %p60 = scmp.eq.s32.totalorder %s22, 1
      %p61 = por %p59, %p60
      %p62 = scmp.ne.s32.totalorder %s53, %s54
      %p63 = scmp.eq.s32.totalorder %s22, 0
      %p64 = por %p62, %p63
      %p65 = scmp.ne.s32.totalorder %s53, %s54
      %p66 = scmp.eq.s32.totalorder %s23, 1
      %p67 = por %p65, %p66
      %p69 = scmp.ne.s32.totalorder %s54, %s68
      %p70 = scmp.eq.s32.totalorder %s23, 0
      %p71 = por %p69, %p70
      %s73 = sadd.s32 %s72, 1
      %p76 = scmp.eq.s32.totalorder %s17, 1
      %p77 = scmp.ne.s32.totalorder %s72, %s74
      %p78 = scmp.eq.s32.totalorder %s17, 0
      %p79 = por %p77, %p78
      %p80 = scmp.ne.s32.totalorder %s72, %s74
      %p81 = scmp.eq.s32.totalorder %s22, 1
      %p82 = por %p80, %p81
      %p83 = scmp.ne.s32.totalorder %s74, %s75
      %p84 = scmp.eq.s32.totalorder %s22, 0
      %p85 = por %p83, %p84
      %p86 = scmp.ne.s32.totalorder %s74, %s75
      %p87 = scmp.eq.s32.totalorder %s23, 1
      %p88 = por %p86, %p87
      %p90 = scmp.ne.s32.totalorder %s75, %s89
      %p91 = scmp.eq.s32.totalorder %s23, 0
      %p92 = por %p90, %p91
      %s94 = sadd.s32 %s93, 1
      %p97 = scmp.eq.s32.totalorder %s17, 1
      %p98 = scmp.ne.s32.totalorder %s93, %s95
      %p99 = scmp.eq.s32.totalorder %s17, 0
      %p100 = por %p98, %p99
      %p101 = scmp.ne.s32.totalorder %s93, %s95
      %p102 = scmp.eq.s32.totalorder %s22, 1
      %p103 = por %p101, %p102
      %p104 = scmp.ne.s32.totalorder %s95, %s96
      %p105 = scmp.eq.s32.totalorder %s22, 0
      %p106 = por %p104, %p105
      %p107 = scmp.ne.s32.totalorder %s95, %s96
      %p108 = scmp.eq.s32.totalorder %s23, 1
      %p109 = por %p107, %p108
      %p111 = scmp.ne.s32.totalorder %s96, %s110
      %p112 = scmp.eq.s32.totalorder %s23, 0
      %p113 = por %p111, %p112
      %s115 = sadd.s32 %s114, 1
      %p118 = scmp.eq.s32.totalorder %s17, 1
      %p119 = scmp.ne.s32.totalorder %s114, %s116
      %p120 = scmp.eq.s32.totalorder %s17, 0
      %p121 = por %p119, %p120
      %p122 = scmp.ne.s32.totalorder %s114, %s116
      %p123 = scmp.eq.s32.totalorder %s22, 1
      %p124 = por %p122, %p123
      %p125 = scmp.ne.s32.totalorder %s116, %s117
      %p126 = scmp.eq.s32.totalorder %s22, 0
      %p127 = por %p125, %p126
      %p128 = scmp.ne.s32.totalorder %s116, %s117
      %p129 = scmp.eq.s32.totalorder %s23, 1
      %p130 = por %p128, %p129
      %p132 = scmp.ne.s32.totalorder %s117, %s131
      %p133 = scmp.eq.s32.totalorder %s23, 0
      %p134 = por %p132, %p133
      %s136 = sadd.s32 %s135, 1
      %p139 = scmp.eq.s32.totalorder %s17, 1
      %p140 = scmp.ne.s32.totalorder %s135, %s137
      %p141 = scmp.eq.s32.totalorder %s17, 0
      %p142 = por %p140, %p141
      %p143 = scmp.ne.s32.totalorder %s135, %s137
      %p144 = scmp.eq.s32.totalorder %s22, 1
      %p145 = por %p143, %p144
      %p146 = scmp.ne.s32.totalorder %s137, %s138
      %p147 = scmp.eq.s32.totalorder %s22, 0
      %p148 = por %p146, %p147
      %p149 = scmp.ne.s32.totalorder %s137, %s138
      %p150 = scmp.eq.s32.totalorder %s23, 1
      %p151 = por %p149, %p150
      %p153 = scmp.ne.s32.totalorder %s138, %s152
      %p154 = scmp.eq.s32.totalorder %s23, 0
      %p155 = por %p153, %p154
      %s157 = sadd.s32 %s156, 1
      %p160 = scmp.eq.s32.totalorder %s17, 1
      %p161 = scmp.ne.s32.totalorder %s156, %s158
      %p162 = scmp.eq.s32.totalorder %s17, 0
      %p163 = por %p161, %p162
      %p164 = scmp.ne.s32.totalorder %s156, %s158
      %p165 = scmp.eq.s32.totalorder %s22, 1
      %p166 = por %p164, %p165
      %p167 = scmp.ne.s32.totalorder %s158, %s159
      %p168 = scmp.eq.s32.totalorder %s22, 0
      %p169 = por %p167, %p168
      %p170 = scmp.ne.s32.totalorder %s158, %s159
      %p171 = scmp.eq.s32.totalorder %s23, 1
      %p172 = por %p170, %p171
      %p174 = scmp.ne.s32.totalorder %s159, %s173
      %p175 = scmp.eq.s32.totalorder %s23, 0
      %p176 = por %p174, %p175
      %s178 = sadd.s32 %s177, 1
      %p181 = scmp.eq.s32.totalorder %s17, 1
      %p182 = scmp.ne.s32.totalorder %s177, %s179
      %p183 = scmp.eq.s32.totalorder %s17, 0
      %p184 = por %p182, %p183
      %p185 = scmp.ne.s32.totalorder %s177, %s179
      %p186 = scmp.eq.s32.totalorder %s22, 1
      %p187 = por %p185, %p186
      %p188 = scmp.ne.s32.totalorder %s179, %s180
      %p189 = scmp.eq.s32.totalorder %s22, 0
      %p190 = por %p188, %p189
      %p191 = scmp.ne.s32.totalorder %s179, %s180
      %p192 = scmp.eq.s32.totalorder %s23, 1
      %p193 = por %p191, %p192
      %p195 = scmp.ne.s32.totalorder %s180, %s194
      %p196 = scmp.eq.s32.totalorder %s23, 0
      %p197 = por %p195, %p196
      %s198 = ssub.s32 %s17, %s24
      %p199 = scmp.eq.s32.totalorder %s198, 0
      %s201 = sadd.s32 %s200, 1
      %s202 = scalar_select %p199, %s200, %s201
      %p205 = pneg %p199
      %p206 = scmp.eq.s32.totalorder %s17, 1
      %p207 = por %p205, %p206
      %p208 = scmp.ne.s32.totalorder %s200, %s203
      %p209 = scmp.eq.s32.totalorder %s17, 0
      %p210 = por %p208, %p209
      %p211 = scmp.ne.s32.totalorder %s200, %s203
      %p212 = scmp.eq.s32.totalorder %s22, 1
      %p213 = por %p211, %p212
      %p214 = scmp.ne.s32.totalorder %s203, %s204
      %p215 = scmp.eq.s32.totalorder %s22, 0
      %p216 = por %p214, %p215
      %p217 = scmp.ne.s32.totalorder %s203, %s204
      %p218 = scmp.eq.s32.totalorder %s23, 1
      %p219 = por %p217, %p218
      %p221 = scmp.ne.s32.totalorder %s204, %s220
      %p222 = scmp.eq.s32.totalorder %s23, 0
      %p223 = por %p221, %p222
      %p224 = scmp.le.s32.totalorder 1, %s17
      %p225 = scmp.lt.s32.totalorder %s17, 3
      %p226 = pnand %p224, %p225
      %p227 = pneg %p226
      // Predicated region
      $region9: #{tpu_custom_call.1} parent=5 // pred_check
        _
      $region10: #{tpu_custom_call.1} parent=5 // pred_check_branch
        %229 = sbr.rel (%p226) target = $region12
      $region11: #{tpu_custom_call.1} parent=5 // pred_region
        %s230 = ssub.s32 %s17, 1
        // Predicated region
        $region13: #{tpu_custom_call.1} parent=11 // pred_check
          %p231 = pneg %p64
        $region14: #{tpu_custom_call.1} parent=11 // pred_check_branch
          %233 = sbr.rel (%p231) target = $region16
        $region15: #{tpu_custom_call.1} parent=11 // pred_region
          _
        $region16: #{tpu_custom_call.1} parent=11 // pred_fallthru
          _
        // Predicated region
        $region17: #{tpu_custom_call.1} parent=11 // pred_check
          %p234 = pneg %p85
        $region18: #{tpu_custom_call.1} parent=11 // pred_check_branch
          %236 = sbr.rel (%p234) target = $region20
        $region19: #{tpu_custom_call.1} parent=11 // pred_region
          _
        $region20: #{tpu_custom_call.1} parent=11 // pred_fallthru
          _
        // Predicated region
        $region21: #{tpu_custom_call.1} parent=11 // pred_check
          %p237 = pneg %p106
        $region22: #{tpu_custom_call.1} parent=11 // pred_check_branch
          %239 = sbr.rel (%p237) target = $region24
        $region23: #{tpu_custom_call.1} parent=11 // pred_region
          _
        $region24: #{tpu_custom_call.1} parent=11 // pred_fallthru
          _
        // Predicated region
        $region25: #{tpu_custom_call.1} parent=11 // pred_check
          %p240 = pneg %p127
        $region26: #{tpu_custom_call.1} parent=11 // pred_check_branch
          %242 = sbr.rel (%p240) target = $region28
        $region27: #{tpu_custom_call.1} parent=11 // pred_region
          _
        $region28: #{tpu_custom_call.1} parent=11 // pred_fallthru
          _
        // Predicated region
        $region29: #{tpu_custom_call.1} parent=11 // pred_check
          %p243 = pneg %p148
        $region30: #{tpu_custom_call.1} parent=11 // pred_check_branch
          %245 = sbr.rel (%p243) target = $region32
        $region31: #{tpu_custom_call.1} parent=11 // pred_region
          _
        $region32: #{tpu_custom_call.1} parent=11 // pred_fallthru
          _
        // Predicated region
        $region33: #{tpu_custom_call.1} parent=11 // pred_check
          %p246 = pneg %p169
        $region34: #{tpu_custom_call.1} parent=11 // pred_check_branch
          %248 = sbr.rel (%p246) target = $region36
        $region35: #{tpu_custom_call.1} parent=11 // pred_region
          _
        $region36: #{tpu_custom_call.1} parent=11 // pred_fallthru
          _
        // Predicated region
        $region37: #{tpu_custom_call.1} parent=11 // pred_check
          %p249 = pneg %p190
        $region38: #{tpu_custom_call.1} parent=11 // pred_check_branch
          %251 = sbr.rel (%p249) target = $region40
        $region39: #{tpu_custom_call.1} parent=11 // pred_region
          _
        $region40: #{tpu_custom_call.1} parent=11 // pred_fallthru
          _
      $region12: #{tpu_custom_call.1} parent=5 // pred_fallthru
        _
      %p252 = scmp.lt.s32.totalorder %s17, 2
      // Predicated region
      $region41: #{tpu_custom_call.1} parent=5 // pred_check
        %p253 = pneg %p252
      $region42: #{tpu_custom_call.1} parent=5 // pred_check_branch
        %255 = sbr.rel (%p253) target = $region44
      $region43: #{tpu_custom_call.1} parent=5 // pred_region
        // Predicated region
        $region45: #{tpu_custom_call.1} parent=43 // pred_check
          %p256 = pneg %p37
        $region46: #{tpu_custom_call.1} parent=43 // pred_check_branch
          %258 = sbr.rel (%p256) target = $region48
        $region47: #{tpu_custom_call.1} parent=43 // pred_region
          %p259 = scmp.lt.s32.totalorder %s17, 1
          %s260 = scalar_select %p259, %s17, 1
          %s261 = smul.addr %s260, 2
          %s262 = smul.addr %s261, 4
          %s263 = scalar_lea.vmem %s0, %s262
        $region48: #{tpu_custom_call.1} parent=43 // pred_fallthru
          _
      $region44: #{tpu_custom_call.1} parent=5 // pred_fallthru
        _
      %p264 = scmp.le.s32.totalorder 1, %s17
      %p265 = scmp.lt.s32.totalorder %s17, 3
      %p266 = pnand %p264, %p265
      %p267 = pneg %p266
      // Predicated region
      $region49: #{tpu_custom_call.1} parent=5 // pred_check
        _
      $region50: #{tpu_custom_call.1} parent=5 // pred_check_branch
        %269 = sbr.rel (%p266) target = $region52
      $region51: #{tpu_custom_call.1} parent=5 // pred_region
        %s270 = ssub.s32 %s17, 1
        %p271 = scmp.lt.s32.totalorder %s22, 1
        %s272 = scalar_select %p271, %s22, 1
        %s273 = smul.addr %s272, 2
        %s274 = smul.addr %s273, 4
        %s275 = scalar_lea.vmem %s0, %s274
        %p276 = pneg %p43
        %p277 = pneg %p40
        %p278 = pneg %p64
        %p279 = pneg %p61
        %p280 = pneg %p85
        %p281 = pneg %p82
        %p282 = pneg %p106
        %p283 = pneg %p103
        %p284 = pneg %p127
        %p285 = pneg %p124
        %p286 = pneg %p148
        %p287 = pneg %p145
        %p288 = pneg %p169
        %p289 = pneg %p166
        %p290 = pneg %p190
        %p291 = pneg %p187
        %p292 = pneg %p216
        %p293 = pneg %p213
        %s294 = sand.u32 %s203, 1
        %s295 = scalar_lea.sflag [#allocation3], %s294
        %s296 = sand.u32 %s203, 1
        %s297 = smul.addr %s296, 128
        %s298 = scalar_lea.vmem [#allocation2], %s297
        %p299 = scmp.lt.s32.totalorder %s22, 1
        %s300 = scalar_select %p299, %s22, 1
        %s301 = smul.addr %s300, 2
        %s302 = smul.addr %s301, 4
        %s303 = scalar_lea.vmem %s0, %s302
        %v304 = vld [vmem:[%s1] sm:$0xff]
        %v305 = vld [vmem:[%s1 + $0x8] sm:$0xff]
        %v306 = vld [vmem:[%s1 + $0x10] sm:$0xff]
        %v307 = vld [vmem:[%s1 + $0x18] sm:$0xff]
        %v308 = vld [vmem:[%s2] sm:$0xff]
        %v309 = vld [vmem:[%s2 + $0x8] sm:$0xff]
        %v310 = vld [vmem:[%s2 + $0x10] sm:$0xff]
        %v311 = vld [vmem:[%s2 + $0x18] sm:$0xff]
        %v312 = vld [vmem:[%s3] sm:$0xff]
        %v313 = vld [vmem:[%s3 + $0x8] sm:$0xff]
        %v314 = vld [vmem:[%s3 + $0x10] sm:$0xff]
        %v315 = vld [vmem:[%s3 + $0x18] sm:$0xff]
        %v316 = vld [vmem:[%s4] sm:$0xff]
        %v317 = vld [vmem:[%s4 + $0x8] sm:$0xff]
        %v318 = vld [vmem:[%s4 + $0x10] sm:$0xff]
        %v319 = vld [vmem:[%s4 + $0x18] sm:$0xff]
        %v320 = vld [vmem:[%s5] sm:$0xff]
        %v321 = vld [vmem:[%s5 + $0x8] sm:$0xff]
        %v322 = vld [vmem:[%s5 + $0x10] sm:$0xff]
        %v323 = vld [vmem:[%s5 + $0x18] sm:$0xff]
        %v324 = vld [vmem:[%s6] sm:$0xff]
        %v325 = vld [vmem:[%s6 + $0x8] sm:$0xff]
        %v326 = vld [vmem:[%s6 + $0x10] sm:$0xff]
        %v327 = vld [vmem:[%s6 + $0x18] sm:$0xff]
        %v328 = vld [vmem:[%s6 + $0x20] sm:$0xff]
        %v329 = vld [vmem:[%s6 + $0x28] sm:$0xff]
        %v330 = vld [vmem:[%s6 + $0x30] sm:$0xff]
        %v331 = vld [vmem:[%s6 + $0x38] sm:$0xff]
        %v332 = vld [vmem:[%s7] sm:$0xff]
        %v333 = vld [vmem:[%s7 + $0x8] sm:$0xff]
        %v334 = vld [vmem:[%s7 + $0x10] sm:$0xff]
        %v335 = vld [vmem:[%s7 + $0x18] sm:$0xff]
        %v336 = vld [vmem:[%s7 + $0x20] sm:$0xff]
        %v337 = vld [vmem:[%s7 + $0x28] sm:$0xff]
        %v338 = vld [vmem:[%s7 + $0x30] sm:$0xff]
        %v339 = vld [vmem:[%s7 + $0x38] sm:$0xff]
        %v340 = vld [vmem:[%s303] sm:$0xff]
        %v342 = vcombine.high %v340, %v340
        %vm343 = vcmask 31744
        %v345 = vsel %vm343, %v304, 0
        %v348 = vsel %vm343, %v305, 0
        %v351 = vsel %vm343, %v306, 0
        %v354 = vsel %vm343, %v307, 0
        %vm356 = vcmask 1043456
        %v357 = vsel %vm356, %v340, 0
        %v359 = vsel %vm356, %v342, 0
        %361 = vmatprep.subr.mxu0 %v359
        %362 = vmatpush1.msra.mxu0 %v357
        %363 = vmatprep.subr.mxu0 0.0
        %364 = vmatpush1.msra.mxu0 0.0
        %365 = vmatprep.subr.mxu0 0.0
        %366 = vmatpush1.msra.mxu0 0.0
        %367 = vmatprep.subr.mxu0 0.0
        %368 = vmatpush1.msra.mxu0 0.0
        %369 = vmatprep.subr.mxu0 0.0
        %370 = vmatpush1.msra.mxu0 0.0
        %371 = vmatprep.subr.mxu0 0.0
        %372 = vmatpush1.msra.mxu0 0.0
        %373 = vmatprep.subr.mxu0 0.0
        %374 = vmatpush1.msra.mxu0 0.0
        %375 = vmatprep.subr.mxu0 0.0
        %376 = vmatpush1.msra.mxu0 0.0
        %377 = vmatprep.subr.mxu0 0.0
        %378 = vmatpush1.msra.mxu0 0.0
        %379 = vmatprep.subr.mxu0 0.0
        %380 = vmatpush1.msra.mxu0 0.0
        %381 = vmatprep.subr.mxu0 0.0
        %382 = vmatpush1.msra.mxu0 0.0
        %383 = vmatprep.subr.mxu0 0.0
        %384 = vmatpush1.msra.mxu0 0.0
        %385 = vmatprep.subr.mxu0 0.0
        %386 = vmatpush1.msra.mxu0 0.0
        %387 = vmatprep.subr.mxu0 0.0
        %388 = vmatpush1.msra.mxu0 0.0
        %389 = vmatprep.subr.mxu0 0.0
        %390 = vmatpush1.msra.mxu0 0.0
        %391 = vmatprep.subr.mxu0 0.0
        %392 = vmatpush1.msra.mxu0 0.0
        %393 = vmatprep.subr.mxu0 0.0
        %394 = vmatpush1.msra.mxu0 0.0
        %395 = vmatprep.subr.mxu0 0.0
        %396 = vmatpush1.msra.mxu0 0.0
        %397 = vmatprep.subr.mxu0 0.0
        %398 = vmatpush1.msra.mxu0 0.0
        %399 = vmatprep.subr.mxu0 0.0
        %400 = vmatpush1.msra.mxu0 0.0
        %401 = vmatprep.subr.mxu0 0.0
        %402 = vmatpush1.msra.mxu0 0.0
        %403 = vmatprep.subr.mxu0 0.0
        %404 = vmatpush1.msra.mxu0 0.0
        %405 = vmatprep.subr.mxu0 0.0
        %406 = vmatpush1.msra.mxu0 0.0
        %407 = vmatprep.subr.mxu0 0.0
        %408 = vmatpush1.msra.mxu0 0.0
        %409 = vmatprep.subr.mxu0 0.0
        %410 = vmatpush1.msra.mxu0 0.0
        %411 = vmatprep.subr.mxu0 0.0
        %412 = vmatpush1.msra.mxu0 0.0
        %413 = vmatprep.subr.mxu0 0.0
        %414 = vmatpush1.msra.mxu0 0.0
        %415 = vmatprep.subr.mxu0 0.0
        %416 = vmatpush1.msra.mxu0 0.0
        %417 = vmatprep.subr.mxu0 0.0
        %418 = vmatpush1.msra.mxu0 0.0
        %419 = vmatprep.subr.mxu0 0.0
        %420 = vmatpush1.msra.mxu0 0.0
        %421 = vmatprep.subr.mxu0 0.0
        %422 = vmatpush1.msra.mxu0 0.0
        %423 = vmatprep.subr.mxu0 0.0
        %424 = vmatpush1.msra.mxu0 0.0
        %425 = vmatprep.mubr.f32.mxu0 0.0
        %426 = vmatmul.mubr.f32.gmra.mrb[0].mxu0 %v345
        %v427 = vpop.f32.mrb[0].mxu0
        %v428 = vadd.f32 0.0, %v427
        %v429 = vpop.f32.mrb[0].mxu0
        %v430 = vadd.f32 0.0, %v429
        %431 = vmatprep.mubr.f32.mxu0 0.0
        %432 = vmatmul.mubr.f32.gmra.mrb[0].mxu0 %v348
        %v433 = vpop.f32.mrb[0].mxu0
        %v434 = vadd.f32 0.0, %v433
        %v435 = vpop.f32.mrb[0].mxu0
        %v436 = vadd.f32 0.0, %v435
        %437 = vmatprep.mubr.f32.mxu0 0.0
        %438 = vmatmul.mubr.f32.gmra.mrb[0].mxu0 %v351
        %v439 = vpop.f32.mrb[0].mxu0
        %v440 = vadd.f32 0.0, %v439
        %v441 = vpop.f32.mrb[0].mxu0
        %v442 = vadd.f32 0.0, %v441
        %443 = vmatprep.mubr.f32.mxu0 0.0
        %444 = vmatmul.mubr.f32.gmra.mrb[0].mxu0 %v354
        %v445 = vpop.f32.mrb[0].mxu0
        %v446 = vadd.f32 0.0, %v445
        %v447 = vpop.f32.mrb[0].mxu0
        %v448 = vadd.f32 0.0, %v447
        %449 = vdwg.mxu0
        %v450 = vadd.f32 %v428, %v430
        %451 = vadd.xlane.f32.xlu0 %v450
        %v452 = vpop.xlane.xlu0 %451
        %v453 = vadd.f32 %v434, %v436
        %454 = vadd.xlane.f32.xlu0 %v453
        %v455 = vpop.xlane.xlu0 %454
        %v456 = vadd.f32 %v440, %v442
        %457 = vadd.xlane.f32.xlu0 %v456
        %v458 = vpop.xlane.xlu0 %457
        %v459 = vadd.f32 %v446, %v448
        %460 = vadd.xlane.f32.xlu0 %v459
        %v461 = vpop.xlane.xlu0 %460
        %v462 = vmul.f32 %v428, %v428
        %v463 = vmul.f32 %v430, %v430
        %v464 = vmul.f32 %v434, %v434
        %v465 = vmul.f32 %v436, %v436
        %v466 = vmul.f32 %v440, %v440
        %v467 = vmul.f32 %v442, %v442
        %v468 = vmul.f32 %v446, %v446
        %v469 = vmul.f32 %v448, %v448
        %v470 = vadd.f32 %v462, %v463
        %471 = vadd.xlane.f32.xlu0 %v470
        %v472 = vpop.xlane.xlu0 %471
        %v473 = vadd.f32 %v464, %v465
        %474 = vadd.xlane.f32.xlu0 %v473
        %v475 = vpop.xlane.xlu0 %474
        %v476 = vadd.f32 %v466, %v467
        %477 = vadd.xlane.f32.xlu0 %v476
        %v478 = vpop.xlane.xlu0 %477
        %v479 = vadd.f32 %v468, %v469
        %480 = vadd.xlane.f32.xlu0 %v479
        %v481 = vpop.xlane.xlu0 %480
        %v482 = vmul.f32 %v308, 256.0
        %v483 = vmul.f32 %v309, 256.0
        %v484 = vmul.f32 %v310, 256.0
        %v485 = vmul.f32 %v311, 256.0
        %v486 = vadd.f32 %v452, %v482
        %v487 = vadd.f32 %v455, %v483
        %v488 = vadd.f32 %v458, %v484
        %v489 = vadd.f32 %v461, %v485
        %v490 = vmul.f32 %v308, 2.0
        %v491 = vmul.f32 %v309, 2.0
        %v492 = vmul.f32 %v310, 2.0
        %v493 = vmul.f32 %v311, 2.0
        %v494 = vmul.f32 %v490, %v452
        %v495 = vmul.f32 %v491, %v455
        %v496 = vmul.f32 %v492, %v458
        %v497 = vmul.f32 %v493, %v461
        %v498 = vadd.f32 %v472, %v494
        %v499 = vadd.f32 %v475, %v495
        %v500 = vadd.f32 %v478, %v496
        %v501 = vadd.f32 %v481, %v497
        %v502 = vmul.f32 %v308, %v308
        %v503 = vmul.f32 %v309, %v309
        %v504 = vmul.f32 %v310, %v310
        %v505 = vmul.f32 %v311, %v311
        %v506 = vmul.f32 %v502, 256.0
        %v507 = vmul.f32 %v503, 256.0
        %v508 = vmul.f32 %v504, 256.0
        %v509 = vmul.f32 %v505, 256.0
        %v510 = vadd.f32 %v498, %v506
        %v511 = vadd.f32 %v499, %v507
        %v512 = vadd.f32 %v500, %v508
        %v513 = vadd.f32 %v501, %v509
        %vm514 = vcmask 261120
        %v516 = vsel %vm514, %v320, 0
        %v519 = vsel %vm514, %v321, 0
        %v522 = vsel %vm514, %v322, 0
        %v525 = vsel %vm514, %v323, 0
        %527 = vmatprep.subr.mxu0 0.0
        %528 = vmatpush1.msra.mxu0 %v486
        %529 = vmatprep.subr.mxu0 0.0
        %530 = vmatpush1.msra.mxu0 %v487
        %531 = vmatprep.subr.mxu0 0.0
        %532 = vmatpush1.msra.mxu0 %v488
        %533 = vmatprep.subr.mxu0 0.0
        %534 = vmatpush1.msra.mxu0 %v489
        %535 = vmatprep.subr.mxu0 0.0
        %536 = vmatpush1.msra.mxu0 0.0
        %537 = vmatprep.subr.mxu0 0.0
        %538 = vmatpush1.msra.mxu0 0.0
        %539 = vmatprep.subr.mxu0 0.0
        %540 = vmatpush1.msra.mxu0 0.0
        %541 = vmatprep.subr.mxu0 0.0
        %542 = vmatpush1.msra.mxu0 0.0
        %543 = vmatprep.subr.mxu0 0.0
        %544 = vmatpush1.msra.mxu0 0.0
        %545 = vmatprep.subr.mxu0 0.0
        %546 = vmatpush1.msra.mxu0 0.0
        %547 = vmatprep.subr.mxu0 0.0
        %548 = vmatpush1.msra.mxu0 0.0
        %549 = vmatprep.subr.mxu0 0.0
        %550 = vmatpush1.msra.mxu0 0.0
        %551 = vmatprep.subr.mxu0 0.0
        %552 = vmatpush1.msra.mxu0 0.0
        %553 = vmatprep.subr.mxu0 0.0
        %554 = vmatpush1.msra.mxu0 0.0
        %555 = vmatprep.subr.mxu0 0.0
        %556 = vmatpush1.msra.mxu0 0.0
        %557 = vmatprep.subr.mxu0 0.0
        %558 = vmatpush1.msra.mxu0 0.0
        %559 = vmatprep.subr.mxu0 0.0
        %560 = vmatpush1.msra.mxu0 0.0
        %561 = vmatprep.subr.mxu0 0.0
        %562 = vmatpush1.msra.mxu0 0.0
        %563 = vmatprep.subr.mxu0 0.0
        %564 = vmatpush1.msra.mxu0 0.0
        %565 = vmatprep.subr.mxu0 0.0
        %566 = vmatpush1.msra.mxu0 0.0
        %567 = vmatprep.subr.mxu0 0.0
        %568 = vmatpush1.msra.mxu0 0.0
        %569 = vmatprep.subr.mxu0 0.0
        %570 = vmatpush1.msra.mxu0 0.0
        %571 = vmatprep.subr.mxu0 0.0
        %572 = vmatpush1.msra.mxu0 0.0
        %573 = vmatprep.subr.mxu0 0.0
        %574 = vmatpush1.msra.mxu0 0.0
        %575 = vmatprep.subr.mxu0 0.0
        %576 = vmatpush1.msra.mxu0 0.0
        %577 = vmatprep.subr.mxu0 0.0
        %578 = vmatpush1.msra.mxu0 0.0
        %579 = vmatprep.subr.mxu0 0.0
        %580 = vmatpush1.msra.mxu0 0.0
        %581 = vmatprep.subr.mxu0 0.0
        %582 = vmatpush1.msra.mxu0 0.0
        %583 = vmatprep.subr.mxu0 0.0
        %584 = vmatpush1.msra.mxu0 0.0
        %585 = vmatprep.subr.mxu0 0.0
        %586 = vmatpush1.msra.mxu0 0.0
        %587 = vmatprep.subr.mxu0 0.0
        %588 = vmatpush1.msra.mxu0 0.0
        %589 = vmatprep.subr.mxu0 0.0
        %590 = vmatpush1.msra.mxu0 0.0
        %591 = vmatprep.mubr.f32.mxu0 0.0
        %592 = vmatmul.mubr.f32.gmra.mrb[0].mxu0 %v516
        %v593 = vpop.f32.mrb[0].mxu0
        %v594 = vadd.f32 0.0, %v593
        %v595 = vpop.f32.mrb[0].mxu0
        %596 = vmatprep.mubr.f32.mxu0 0.0
        %597 = vmatmul.mubr.f32.gmra.mrb[0].mxu0 %v519
        %v598 = vpop.f32.mrb[0].mxu0
        %v599 = vadd.f32 0.0, %v598
        %v600 = vpop.f32.mrb[0].mxu0
        %601 = vmatprep.mubr.f32.mxu0 0.0
        %602 = vmatmul.mubr.f32.gmra.mrb[0].mxu0 %v522
        %v603 = vpop.f32.mrb[0].mxu0
        %v604 = vadd.f32 0.0, %v603
        %v605 = vpop.f32.mrb[0].mxu0
        %606 = vmatprep.mubr.f32.mxu0 0.0
        %607 = vmatmul.mubr.f32.gmra.mrb[0].mxu0 %v525
        %v608 = vpop.f32.mrb[0].mxu0
        %v609 = vadd.f32 0.0, %v608
        %v610 = vpop.f32.mrb[0].mxu0
        %611 = vdwg.mxu0
        %612 = vmatprep.subr.mxu0 0.0
        %613 = vmatpush1.msra.mxu0 %v510
        %614 = vmatprep.subr.mxu0 0.0
        %615 = vmatpush1.msra.mxu0 %v511
        %616 = vmatprep.subr.mxu0 0.0
        %617 = vmatpush1.msra.mxu0 %v512
        %618 = vmatprep.subr.mxu0 0.0
        %619 = vmatpush1.msra.mxu0 %v513
        %620 = vmatprep.subr.mxu0 0.0
        %621 = vmatpush1.msra.mxu0 0.0
        %622 = vmatprep.subr.mxu0 0.0
        %623 = vmatpush1.msra.mxu0 0.0
        %624 = vmatprep.subr.mxu0 0.0
        %625 = vmatpush1.msra.mxu0 0.0
        %626 = vmatprep.subr.mxu0 0.0
        %627 = vmatpush1.msra.mxu0 0.0
        %628 = vmatprep.subr.mxu0 0.0
        %629 = vmatpush1.msra.mxu0 0.0
        %630 = vmatprep.subr.mxu0 0.0
        %631 = vmatpush1.msra.mxu0 0.0
        %632 = vmatprep.subr.mxu0 0.0
        %633 = vmatpush1.msra.mxu0 0.0
        %634 = vmatprep.subr.mxu0 0.0
        %635 = vmatpush1.msra.mxu0 0.0
        %636 = vmatprep.subr.mxu0 0.0
        %637 = vmatpush1.msra.mxu0 0.0
        %638 = vmatprep.subr.mxu0 0.0
        %639 = vmatpush1.msra.mxu0 0.0
        %640 = vmatprep.subr.mxu0 0.0
        %641 = vmatpush1.msra.mxu0 0.0
        %642 = vmatprep.subr.mxu0 0.0
        %643 = vmatpush1.msra.mxu0 0.0
        %644 = vmatprep.subr.mxu0 0.0
        %645 = vmatpush1.msra.mxu0 0.0
        %646 = vmatprep.subr.mxu0 0.0
        %647 = vmatpush1.msra.mxu0 0.0
        %648 = vmatprep.subr.mxu0 0.0
        %649 = vmatpush1.msra.mxu0 0.0
        %650 = vmatprep.subr.mxu0 0.0
        %651 = vmatpush1.msra.mxu0 0.0
        %652 = vmatprep.subr.mxu0 0.0
        %653 = vmatpush1.msra.mxu0 0.0
        %654 = vmatprep.subr.mxu0 0.0
        %655 = vmatpush1.msra.mxu0 0.0
        %656 = vmatprep.subr.mxu0 0.0
        %657 = vmatpush1.msra.mxu0 0.0
        %658 = vmatprep.subr.mxu0 0.0
        %659 = vmatpush1.msra.mxu0 0.0
        %660 = vmatprep.subr.mxu0 0.0
        %661 = vmatpush1.msra.mxu0 0.0
        %662 = vmatprep.subr.mxu0 0.0
        %663 = vmatpush1.msra.mxu0 0.0
        %664 = vmatprep.subr.mxu0 0.0
        %665 = vmatpush1.msra.mxu0 0.0
        %666 = vmatprep.subr.mxu0 0.0
        %667 = vmatpush1.msra.mxu0 0.0
        %668 = vmatprep.subr.mxu0 0.0
        %669 = vmatpush1.msra.mxu0 0.0
        %670 = vmatprep.subr.mxu0 0.0
        %671 = vmatpush1.msra.mxu0 0.0
        %672 = vmatprep.subr.mxu0 0.0
        %673 = vmatpush1.msra.mxu0 0.0
        %674 = vmatprep.subr.mxu0 0.0
        %675 = vmatpush1.msra.mxu0 0.0
        %676 = vmatprep.mubr.f32.mxu0 0.0
        %677 = vmatmul.mubr.f32.gmra.mrb[0].mxu0 %v516
        %v678 = vpop.f32.mrb[0].mxu0
        %v679 = vadd.f32 0.0, %v678
        %v680 = vpop.f32.mrb[0].mxu0
        %681 = vmatprep.mubr.f32.mxu0 0.0
        %682 = vmatmul.mubr.f32.gmra.mrb[0].mxu0 %v519
        %v683 = vpop.f32.mrb[0].mxu0
        %v684 = vadd.f32 0.0, %v683
        %v685 = vpop.f32.mrb[0].mxu0
        %686 = vmatprep.mubr.f32.mxu0 0.0
        %687 = vmatmul.mubr.f32.gmra.mrb[0].mxu0 %v522
        %v688 = vpop.f32.mrb[0].mxu0
        %v689 = vadd.f32 0.0, %v688
        %v690 = vpop.f32.mrb[0].mxu0
        %691 = vmatprep.mubr.f32.mxu0 0.0
        %692 = vmatmul.mubr.f32.gmra.mrb[0].mxu0 %v525
        %v693 = vpop.f32.mrb[0].mxu0
        %v694 = vadd.f32 0.0, %v693
        %v695 = vpop.f32.mrb[0].mxu0
        %696 = vdwg.mxu0
        %v697 = vmul.f32 %v594, 0.00048828125
        %v698 = vmul.f32 %v599, 0.00048828125
        %v699 = vmul.f32 %v604, 0.00048828125
        %v700 = vmul.f32 %v609, 0.00048828125
        %v701 = vmul.f32 %v679, 0.00048828125
        %v702 = vmul.f32 %v684, 0.00048828125
        %v703 = vmul.f32 %v689, 0.00048828125
        %v704 = vmul.f32 %v694, 0.00048828125
        %v705 = vmul.f32 %v697, %v697
        %v706 = vmul.f32 %v698, %v698
        %v707 = vmul.f32 %v699, %v699
        %v708 = vmul.f32 %v700, %v700
        %v709 = vsub.f32 %v701, %v705
        %v710 = vsub.f32 %v702, %v706
        %v711 = vsub.f32 %v703, %v707
        %v712 = vsub.f32 %v704, %v708
        %v713 = vadd.f32 %v709, 1e-05
        %v714 = vadd.f32 %v710, 1e-05
        %v715 = vadd.f32 %v711, 1e-05
        %v716 = vadd.f32 %v712, 1e-05
        %v717 = vrsqrt.pop %v713
        %v718 = vrsqrt.pop %v714
        %v719 = vrsqrt.pop %v715
        %v720 = vrsqrt.pop %v716
        %v721 = vmul.f32 %v717, %v312
        %v722 = vmul.f32 %v718, %v313
        %v723 = vmul.f32 %v719, %v314
        %v724 = vmul.f32 %v720, %v315
        %v725 = vsub.f32 %v308, %v697
        %v726 = vsub.f32 %v309, %v698
        %v727 = vsub.f32 %v310, %v699
        %v728 = vsub.f32 %v311, %v700
        %v729 = vmul.f32 %v725, %v721
        %v730 = vmul.f32 %v726, %v722
        %v731 = vmul.f32 %v727, %v723
        %v732 = vmul.f32 %v728, %v724
        %v733 = vadd.f32 %v729, %v316
        %v734 = vadd.f32 %v730, %v317
        %v735 = vadd.f32 %v731, %v318
        %v736 = vadd.f32 %v732, %v319
        %738 = vset.pattern.permute.xlu0 0
        %739 = vperm.xlu0 %738, %v721
        %v740 = vpop.permute.xlu0 %739
        %743 = vset.pattern.permute.xlu0 0
        %744 = vperm.xlu0 %743, %v722
        %v745 = vpop.permute.xlu0 %744
        %748 = vset.pattern.permute.xlu0 0
        %749 = vperm.xlu0 %748, %v723
        %v750 = vpop.permute.xlu0 %749
        %753 = vset.pattern.permute.xlu0 0
        %754 = vperm.xlu0 %753, %v724
        %v755 = vpop.permute.xlu0 %754
        %v757 = vmul.f32 %v428, %v740
        %v758 = vmul.f32 %v430, %v740
        %v759 = vmul.f32 %v434, %v745
        %v760 = vmul.f32 %v436, %v745
        %v761 = vmul.f32 %v440, %v750
        %v762 = vmul.f32 %v442, %v750
        %v763 = vmul.f32 %v446, %v755
        %v764 = vmul.f32 %v448, %v755
        %766 = vset.pattern.permute.xlu0 0
        %767 = vperm.xlu0 %766, %v733
        %v768 = vpop.permute.xlu0 %767
        %771 = vset.pattern.permute.xlu0 0
        %772 = vperm.xlu0 %771, %v734
        %v773 = vpop.permute.xlu0 %772
        %776 = vset.pattern.permute.xlu0 0
        %777 = vperm.xlu0 %776, %v735
        %v778 = vpop.permute.xlu0 %777
        %781 = vset.pattern.permute.xlu0 0
        %782 = vperm.xlu0 %781, %v736
        %v783 = vpop.permute.xlu0 %782
        %v785 = vadd.f32 %v757, %v768
        %v786 = vadd.f32 %v758, %v768
        %v787 = vadd.f32 %v759, %v773
        %v788 = vadd.f32 %v760, %v773
        %v789 = vadd.f32 %v761, %v778
        %v790 = vadd.f32 %v762, %v778
        %v791 = vadd.f32 %v763, %v783
        %v792 = vadd.f32 %v764, %v783
        %v793 = vmul.f32 %v785, 0.2
        %v794 = vmul.f32 %v786, 0.2
        %v795 = vmul.f32 %v787, 0.2
        %v796 = vmul.f32 %v788, 0.2
        %v797 = vmul.f32 %v789, 0.2
        %v798 = vmul.f32 %v790, 0.2
        %v799 = vmul.f32 %v791, 0.2
        %v800 = vmul.f32 %v792, 0.2
        %v801 = vmax.f32 %v785, %v793
        %v802 = vmax.f32 %v786, %v794
        %v803 = vmax.f32 %v787, %v795
        %v804 = vmax.f32 %v788, %v796
        %v805 = vmax.f32 %v789, %v797
        %v806 = vmax.f32 %v790, %v798
        %v807 = vmax.f32 %v791, %v799
        %v808 = vmax.f32 %v792, %v800
        %810 = vset.pattern.permute.xlu0 0
        %811 = vperm.xlu0 %810, %v332
        %v812 = vpop.permute.xlu0 %811
        %815 = vset.pattern.permute.xlu0 0
        %816 = vperm.xlu0 %815, %v333
        %v817 = vpop.permute.xlu0 %816
        %820 = vset.pattern.permute.xlu0 0
        %821 = vperm.xlu0 %820, %v334
        %v822 = vpop.permute.xlu0 %821
        %825 = vset.pattern.permute.xlu0 0
        %826 = vperm.xlu0 %825, %v335
        %v827 = vpop.permute.xlu0 %826
        %830 = vset.pattern.permute.xlu0 0
        %831 = vperm.xlu0 %830, %v336
        %v832 = vpop.permute.xlu0 %831
        %835 = vset.pattern.permute.xlu0 0
        %836 = vperm.xlu0 %835, %v337
        %v837 = vpop.permute.xlu0 %836
        %840 = vset.pattern.permute.xlu0 0
        %841 = vperm.xlu0 %840, %v338
        %v842 = vpop.permute.xlu0 %841
        %845 = vset.pattern.permute.xlu0 0
        %846 = vperm.xlu0 %845, %v339
        %v847 = vpop.permute.xlu0 %846
        %v850 = vsel %vm514, %v324, 0
        %v853 = vsel %vm514, %v325, 0
        %v856 = vsel %vm514, %v326, 0
        %v859 = vsel %vm514, %v327, 0
        %v862 = vsel %vm514, %v328, 0
        %v865 = vsel %vm514, %v329, 0
        %v868 = vsel %vm514, %v330, 0
        %v871 = vsel %vm514, %v331, 0
        %873 = vmatprep.subr.mxu0 %v802
        %874 = vmatpush1.msra.mxu0 %v801
        %875 = vmatprep.subr.mxu0 %v804
        %876 = vmatpush1.msra.mxu0 %v803
        %877 = vmatprep.subr.mxu0 %v806
        %878 = vmatpush1.msra.mxu0 %v805
        %879 = vmatprep.subr.mxu0 %v808
        %880 = vmatpush1.msra.mxu0 %v807
        %881 = vmatprep.subr.mxu0 0.0
        %882 = vmatpush1.msra.mxu0 0.0
        %883 = vmatprep.subr.mxu0 0.0
        %884 = vmatpush1.msra.mxu0 0.0
        %885 = vmatprep.subr.mxu0 0.0
        %886 = vmatpush1.msra.mxu0 0.0
        %887 = vmatprep.subr.mxu0 0.0
        %888 = vmatpush1.msra.mxu0 0.0
        %889 = vmatprep.subr.mxu0 0.0
        %890 = vmatpush1.msra.mxu0 0.0
        %891 = vmatprep.subr.mxu0 0.0
        %892 = vmatpush1.msra.mxu0 0.0
        %893 = vmatprep.subr.mxu0 0.0
        %894 = vmatpush1.msra.mxu0 0.0
        %895 = vmatprep.subr.mxu0 0.0
        %896 = vmatpush1.msra.mxu0 0.0
        %897 = vmatprep.subr.mxu0 0.0
        %898 = vmatpush1.msra.mxu0 0.0
        %899 = vmatprep.subr.mxu0 0.0
        %900 = vmatpush1.msra.mxu0 0.0
        %901 = vmatprep.subr.mxu0 0.0
        %902 = vmatpush1.msra.mxu0 0.0
        %903 = vmatprep.subr.mxu0 0.0
        %904 = vmatpush1.msra.mxu0 0.0
        %905 = vmatprep.subr.mxu0 0.0
        %906 = vmatpush1.msra.mxu0 0.0
        %907 = vmatprep.subr.mxu0 0.0
        %908 = vmatpush1.msra.mxu0 0.0
        %909 = vmatprep.subr.mxu0 0.0
        %910 = vmatpush1.msra.mxu0 0.0
        %911 = vmatprep.subr.mxu0 0.0
        %912 = vmatpush1.msra.mxu0 0.0
        %913 = vmatprep.subr.mxu0 0.0
        %914 = vmatpush1.msra.mxu0 0.0
        %915 = vmatprep.subr.mxu0 0.0
        %916 = vmatpush1.msra.mxu0 0.0
        %917 = vmatprep.subr.mxu0 0.0
        %918 = vmatpush1.msra.mxu0 0.0
        %919 = vmatprep.subr.mxu0 0.0
        %920 = vmatpush1.msra.mxu0 0.0
        %921 = vmatprep.subr.mxu0 0.0
        %922 = vmatpush1.msra.mxu0 0.0
        %923 = vmatprep.subr.mxu0 0.0
        %924 = vmatpush1.msra.mxu0 0.0
        %925 = vmatprep.subr.mxu0 0.0
        %926 = vmatpush1.msra.mxu0 0.0
        %927 = vmatprep.subr.mxu0 0.0
        %928 = vmatpush1.msra.mxu0 0.0
        %929 = vmatprep.subr.mxu0 0.0
        %930 = vmatpush1.msra.mxu0 0.0
        %931 = vmatprep.subr.mxu0 0.0
        %932 = vmatpush1.msra.mxu0 0.0
        %933 = vmatprep.subr.mxu0 0.0
        %934 = vmatpush1.msra.mxu0 0.0
        %935 = vmatprep.subr.mxu0 0.0
        %936 = vmatpush1.msra.mxu0 0.0
        %937 = vmatprep.mubr.f32.mxu0 0.0
        %938 = vmatmul.mubr.f32.gmra.mrb[0].mxu0 %v850
        %v939 = vpop.f32.mrb[0].mxu0
        %v940 = vadd.f32 %v812, %v939
        %v941 = vpop.f32.mrb[0].mxu0
        %v942 = vadd.f32 %v812, %v941
        %943 = vmatprep.mubr.f32.mxu0 0.0
        %944 = vmatmul.mubr.f32.gmra.mrb[0].mxu0 %v853
        %v945 = vpop.f32.mrb[0].mxu0
        %v946 = vadd.f32 %v817, %v945
        %v947 = vpop.f32.mrb[0].mxu0
        %v948 = vadd.f32 %v817, %v947
        %949 = vmatprep.mubr.f32.mxu0 0.0
        %950 = vmatmul.mubr.f32.gmra.mrb[0].mxu0 %v856
        %v951 = vpop.f32.mrb[0].mxu0
        %v952 = vadd.f32 %v822, %v951
        %v953 = vpop.f32.mrb[0].mxu0
        %v954 = vadd.f32 %v822, %v953
        %955 = vmatprep.mubr.f32.mxu0 0.0
        %956 = vmatmul.mubr.f32.gmra.mrb[0].mxu0 %v859
        %v957 = vpop.f32.mrb[0].mxu0
        %v958 = vadd.f32 %v827, %v957
        %v959 = vpop.f32.mrb[0].mxu0
        %v960 = vadd.f32 %v827, %v959
        %961 = vmatprep.mubr.f32.mxu0 0.0
        %962 = vmatmul.mubr.f32.gmra.mrb[0].mxu0 %v862
        %v963 = vpop.f32.mrb[0].mxu0
        %v964 = vadd.f32 %v832, %v963
        %v965 = vpop.f32.mrb[0].mxu0
        %v966 = vadd.f32 %v832, %v965
        %967 = vmatprep.mubr.f32.mxu0 0.0
        %968 = vmatmul.mubr.f32.gmra.mrb[0].mxu0 %v865
        %v969 = vpop.f32.mrb[0].mxu0
        %v970 = vadd.f32 %v837, %v969
        %v971 = vpop.f32.mrb[0].mxu0
        %v972 = vadd.f32 %v837, %v971
        %973 = vmatprep.mubr.f32.mxu0 0.0
        %974 = vmatmul.mubr.f32.gmra.mrb[0].mxu0 %v868
        %v975 = vpop.f32.mrb[0].mxu0
        %v976 = vadd.f32 %v842, %v975
        %v977 = vpop.f32.mrb[0].mxu0
        %v978 = vadd.f32 %v842, %v977
        %979 = vmatprep.mubr.f32.mxu0 0.0
        %980 = vmatmul.mubr.f32.gmra.mrb[0].mxu0 %v871
        %v981 = vpop.f32.mrb[0].mxu0
        %v982 = vadd.f32 %v847, %v981
        %v983 = vpop.f32.mrb[0].mxu0
        %v984 = vadd.f32 %v847, %v983
        %985 = vdwg.mxu0
        %986 = vst [vmem:[%s298] sm:$0xff] %v940
        %987 = vst [vmem:[%s298 + $0x8] sm:$0xff] %v942
        %988 = vst [vmem:[%s298 + $0x10] sm:$0xff] %v946
        %989 = vst [vmem:[%s298 + $0x18] sm:$0xff] %v948
        %990 = vst [vmem:[%s298 + $0x20] sm:$0xff] %v952
        %991 = vst [vmem:[%s298 + $0x28] sm:$0xff] %v954
        %992 = vst [vmem:[%s298 + $0x30] sm:$0xff] %v958
        %993 = vst [vmem:[%s298 + $0x38] sm:$0xff] %v960
        %994 = vst [vmem:[%s298 + $0x40] sm:$0xff] %v964
        %995 = vst [vmem:[%s298 + $0x48] sm:$0xff] %v966
        %996 = vst [vmem:[%s298 + $0x50] sm:$0xff] %v970
        %997 = vst [vmem:[%s298 + $0x58] sm:$0xff] %v972
        %998 = vst [vmem:[%s298 + $0x60] sm:$0xff] %v976
        %999 = vst [vmem:[%s298 + $0x68] sm:$0xff] %v978
        %1000 = vst [vmem:[%s298 + $0x70] sm:$0xff] %v982
        %1001 = vst [vmem:[%s298 + $0x78] sm:$0xff] %v984
        %s1002 = sand.u32 %s203, 1
        %s1003 = scalar_lea.sflag [#allocation3], %s1002
        %s1004 = sand.u32 %s203, 1
        %s1005 = smul.addr %s1004, 128
        %s1006 = scalar_lea.vmem [#allocation2], %s1005
        // Predicated region
        $region53: #{tpu_custom_call.1} parent=51 // pred_check
          %p1007 = pneg %p213
        $region54: #{tpu_custom_call.1} parent=51 // pred_check_branch
          %1009 = sbr.rel (%p1007) target = $region56
        $region55: #{tpu_custom_call.1} parent=51 // pred_region
          %s1011 = ssub.s32 2048, 2048
          %1012 = vsyncadd %s1003, %s1011
          %s1013 = smul.addr %s22, 16
          %s1014 = smul.addr %s1013, 128
          %s1015 = scalar_lea.hbm %s8, %s1014
          %s1016 = sshll.u32 %s1006, 4
          %s1017 = int_to_ptr.vmem [resolvable:$true] %s1016
          %1022 = dma.vmem_to_hbm [thread:$0]  %s1017, 2048, %s1015, %s1003, 256, 256, 16
        $region56: #{tpu_custom_call.1} parent=51 // pred_fallthru
          _
      $region52: #{tpu_custom_call.1} parent=5 // pred_fallthru
        _
      %p1023 = scmp.le.s32.totalorder 2, %s17
      // Predicated region
      $region57: #{tpu_custom_call.1} parent=5 // pred_check
        %p1024 = pneg %p1023
      $region58: #{tpu_custom_call.1} parent=5 // pred_check_branch
        %1026 = sbr.rel (%p1024) target = $region60
      $region59: #{tpu_custom_call.1} parent=5 // pred_region
        %s1027 = ssub.s32 %s17, 2
        // Predicated region
        $region61: #{tpu_custom_call.1} parent=59 // pred_check
          %p1028 = pneg %p219
        $region62: #{tpu_custom_call.1} parent=59 // pred_check_branch
          %1030 = sbr.rel (%p1028) target = $region64
        $region63: #{tpu_custom_call.1} parent=59 // pred_region
          %s1031 = sand.u32 %s204, 1
          %s1032 = scalar_lea.sflag [#allocation3], %s1031
          %s1033 = sand.u32 %s204, 1
          %s1034 = smul.addr %s1033, 128
          %s1035 = scalar_lea.vmem [#allocation2], %s1034
          %1036 = dma.done %s1032, 2048
        $region64: #{tpu_custom_call.1} parent=59 // pred_fallthru
          _
      $region60: #{tpu_custom_call.1} parent=5 // pred_fallthru
        _
    $region6: #{tpu_custom_call.1} parent=1 // loop_footer
      %s21 = sadd.s32 1, %s17
    $region7: #{tpu_custom_call.1} parent=1 // loop_footer_branch
      %16 = sbr.rel target = $region3
    $region8: #{tpu_custom_call.1} parent=1 // loop_exit
      _
    %1037 = vsyncpa [#allocation3], 1
    %s1038 = scalar_lea.sflag [#allocation3], 1
    %1039 = vsyncpa %s1038, 1

</llo_original>
